<compile_context>
chip_gen: v7x
topology: tpu7x:2x2x1
jax: 0.10.0
libtpu: 0.0.40
codegen_flags: <defaults>
</compile_context>

<pallas_src>
import jax
import jax.numpy as jnp
from jax.experimental import pallas as pl
from jax.experimental.pallas import tpu as pltpu


def _round_up(x: int, m: int) -> int:
    return ((x + m - 1) // m) * m


def _gaussian_fuzzy_kernel(x_ref, w_ref, p_ref, o_ref, acc_ref):
    """Computes one (TM, TN) output tile; grid axis 2 iterates Din tiles."""
    k = pl.program_id(2)

    @pl.when(k == 0)
    def _():
        acc_ref[...] = jnp.zeros_like(acc_ref)

    # MXU partial product for this K slice, accumulated in f32.
    acc_ref[...] += jnp.dot(
        x_ref[...], w_ref[...], preferred_element_type=jnp.float32
    )

    @pl.when(k == pl.num_programs(2) - 1)
    def _():
        # Packed params (broadcast over the batch-tile rows):
        #   row 0: bias - centers
        #   row 1: -0.5 / widths**2   (precomputed -> no divide in kernel)
        offset = p_ref[0:1, :]
        neg_inv_2s2 = p_ref[1:2, :]
        d = acc_ref[...] + offset            # == (x @ W.T + b) - centers
        o_ref[...] = jnp.exp(d * d * neg_inv_2s2).astype(o_ref.dtype)


def gaussian_fuzzy_layer(x, weight, bias, centers, widths):
    """x: (B, Din); weight: (Dout, Din); bias/centers/widths: (Dout,)."""
    B, Din = x.shape
    Dout = weight.shape[0]

    # MXU-aligned tiles; adapt down for small problems (always 8/128-aligned).
    TN = 256 if Dout >= 256 else 128
    TM = 256 if B >= 256 else _round_up(B, 8)
    TK = 512 if Din >= 512 else _round_up(Din, 128)

    Bp = _round_up(B, TM)
    Kp = _round_up(Din, TK)
    Np = _round_up(Dout, TN)

    # TODO(synk): in production, store the weight pre-transposed as (Din, Dout)
    # so this transpose (an extra HBM round-trip of W) is not done per call.
    w_t = jnp.transpose(weight).astype(jnp.float32)

    # Zero-padding Din is exact (0-contribution); padded Dout cols are sliced.
    x_p = jnp.pad(x.astype(jnp.float32), ((0, Bp - B), (0, Kp - Din)))
    w_p = jnp.pad(w_t, ((0, Kp - Din), (0, Np - Dout)))

    # Pack (bias - centers) and -0.5/widths^2 into one (8, Np) array
    # (8 rows so the block maps onto a single (8,128) VMEM tile).
    offset = (bias - centers).astype(jnp.float32)
    neg_inv = -0.5 / (widths.astype(jnp.float32) ** 2)
    params = jnp.zeros((8, Np), jnp.float32)
    params = params.at[0, :Dout].set(offset)
    params = params.at[1, :Dout].set(neg_inv)

    grid = (Bp // TM, Np // TN, Kp // TK)

    # Double-buffered inputs/outputs + acc scratch, with 2x headroom,
    # clamped to stay within v7x's 64 MiB physical VMEM.
    vmem_bytes = 4 * (2 * (TM * TK + TK * TN + 8 * TN + TM * TN) + TM * TN)
    vmem_limit = int(min(max(2 * vmem_bytes, 16 << 20), 64 << 20))

    cost = pl.CostEstimate(
        flops=2 * Bp * Kp * Np,
        transcendentals=Bp * Np,
        bytes_accessed=4 * (Bp * Kp + Kp * Np + Bp * Np + 8 * Np),
    )

    out_p = pl.pallas_call(
        _gaussian_fuzzy_kernel,
        out_shape=jax.ShapeDtypeStruct((Bp, Np), jnp.float32),
        grid_spec=pltpu.PrefetchScalarGridSpec(
            num_scalar_prefetch=0,
            grid=grid,
            in_specs=[
                pl.BlockSpec((TM, TK), lambda i, j, k: (i, k)),   # x tile
                pl.BlockSpec((TK, TN), lambda i, j, k: (k, j)),   # W.T tile
                pl.BlockSpec((8, TN), lambda i, j, k: (0, j)),    # packed params
            ],
            out_specs=pl.BlockSpec((TM, TN), lambda i, j, k: (i, j)),
            scratch_shapes=[pltpu.VMEM((TM, TN), jnp.float32)],
        ),
        compiler_params=pltpu.CompilerParams(
            dimension_semantics=("parallel", "parallel", "arbitrary"),
            vmem_limit_bytes=vmem_limit,
        ),
        cost_estimate=cost,
    )(x_p, w_p, params)

    return out_p[:B, :Dout]


def _reference(x, weight, bias, centers, widths):
    y = x @ weight.T + bias
    return jnp.exp(-((y - centers) ** 2) / (2.0 * widths**2))


if __name__ == "__main__":
    key = jax.random.PRNGKey(0)
    k_x, k_w, k_b, k_c = jax.random.split(key, 4)

    batch, input_dim, output_dim = 8, 32, 16

    # Deterministic parameter init (shapes per the module __init__).
    bound = 1.0 / (input_dim ** 0.5)  # nn.Linear default uniform bound
    weight = jax.random.uniform(
        k_w, (output_dim, input_dim), jnp.float32, -bound, bound
    )
    bias = jax.random.uniform(k_b, (output_dim,), jnp.float32, -bound, bound)
    centers = jax.random.normal(k_c, (output_dim,), jnp.float32)  # torch.randn
    widths = jnp.ones((output_dim,), jnp.float32)                 # torch.ones

    x = jax.random.normal(k_x, (batch, input_dim), jnp.float32)

    out = gaussian_fuzzy_layer(x, weight, bias, centers, widths)
    out = jax.block_until_ready(out)

    ref = _reference(x, weight, bias, centers, widths)
    assert out.shape == (batch, output_dim)
    assert jnp.allclose(out, ref, atol=1e-5, rtol=1e-4), (
        float(jnp.max(jnp.abs(out - ref)))
    )

    print("KERNEL_OK")
</pallas_src>

<mosaic_0001>
module attributes {stable_mosaic.version = 11 : i64} {
  func.func @_gaussian_fuzzy_kernel(%arg0: i32, %arg1: i32, %arg2: i32, %arg3: memref<8x128xf32, #tpu.memory_space<vmem>>, %arg4: memref<128x128xf32, #tpu.memory_space<vmem>>, %arg5: memref<8x128xf32, #tpu.memory_space<vmem>>, %arg6: memref<8x128xf32, #tpu.memory_space<vmem>>, %arg7: memref<8x128xf32, #tpu.memory_space<vmem>>) attributes {dimension_semantics = [#tpu.dimension_semantics<parallel>, #tpu.dimension_semantics<parallel>, #tpu.dimension_semantics<arbitrary>], iteration_bounds = array<i64: 1, 1, 1>, scalar_prefetch = 0 : i64, scratch_operands = 1 : i64, tpu.core_type = #tpu.core_type<tc>, window_params = [{transform_indices = @transform_0, window_bounds = array<i64: 8, 128>}, {transform_indices = @transform_1, window_bounds = array<i64: 128, 128>}, {transform_indices = @transform_2, window_bounds = array<i64: 8, 128>}, {transform_indices = @transform_3, window_bounds = array<i64: 8, 128>}]} {
    %c0_i32 = arith.constant 0 : i32
    %0 = arith.cmpi eq, %arg2, %c0_i32 : i32
    %1 = arith.extui %0 : i1 to i32
    %c0_i32_0 = arith.constant 0 : i32
    %2 = arith.cmpi ne, %1, %c0_i32_0 : i32
    scf.if %2 {
      %cst_10 = arith.constant 0.000000e+00 : f32
      %12 = vector.broadcast %cst_10 : f32 to vector<8x128xf32>
      %c0_11 = arith.constant 0 : index
      %c0_12 = arith.constant 0 : index
      %13 = vector.load %arg7[%c0_11, %c0_12] : memref<8x128xf32, #tpu.memory_space<vmem>>, vector<8x128xf32>
      tpu.vector_store %arg7[%c0_11, %c0_12], %12 {strides = array<i32>} : memref<8x128xf32, #tpu.memory_space<vmem>>, vector<8x128xf32>,
    } else {
    }
    %c0 = arith.constant 0 : index
    %c0_1 = arith.constant 0 : index
    %3 = vector.load %arg7[%c0, %c0_1] : memref<8x128xf32, #tpu.memory_space<vmem>>, vector<8x128xf32>
    %c0_2 = arith.constant 0 : index
    %c0_3 = arith.constant 0 : index
    %4 = vector.load %arg3[%c0_2, %c0_3] : memref<8x128xf32, #tpu.memory_space<vmem>>, vector<8x128xf32>
    %c0_4 = arith.constant 0 : index
    %c0_5 = arith.constant 0 : index
    %5 = vector.load %arg4[%c0_4, %c0_5] : memref<128x128xf32, #tpu.memory_space<vmem>>, vector<128x128xf32>
    %cst = arith.constant dense<0.000000e+00> : vector<8x128xf32>
    %6 = tpu.matmul %4, %5, %cst {dimension_numbers = #tpu.dot_dimension_numbers<[1], [0], [0], [1], [0, 0, 1, 1], [], []>} : vector<8x128xf32>, vector<128x128xf32>, vector<8x128xf32> -> vector<8x128xf32>
    %7 = arith.addf %3, %6 : vector<8x128xf32>
    %c0_6 = arith.constant 0 : index
    %c0_7 = arith.constant 0 : index
    %8 = vector.load %arg7[%c0_6, %c0_7] : memref<8x128xf32, #tpu.memory_space<vmem>>, vector<8x128xf32>
    tpu.vector_store %arg7[%c0_6, %c0_7], %7 {strides = array<i32>} : memref<8x128xf32, #tpu.memory_space<vmem>>, vector<8x128xf32>,
    %c0_i32_8 = arith.constant 0 : i32
    %9 = arith.cmpi eq, %arg2, %c0_i32_8 : i32
    %10 = arith.extui %9 : i1 to i32
    %c0_i32_9 = arith.constant 0 : i32
    %11 = arith.cmpi ne, %10, %c0_i32_9 : i32
    scf.if %11 {
      %c0_10 = arith.constant 0 : index
      %c0_11 = arith.constant 0 : index
      %12 = vector.load %arg5[%c0_10, %c0_11] : memref<8x128xf32, #tpu.memory_space<vmem>>, vector<1x128xf32>
      %c1 = arith.constant 1 : index
      %c0_12 = arith.constant 0 : index
      %13 = vector.load %arg5[%c1, %c0_12] : memref<8x128xf32, #tpu.memory_space<vmem>>, vector<1x128xf32>
      %c0_13 = arith.constant 0 : index
      %c0_14 = arith.constant 0 : index
      %14 = vector.load %arg7[%c0_13, %c0_14] : memref<8x128xf32, #tpu.memory_space<vmem>>, vector<8x128xf32>
      %15 = vector.broadcast %12 : vector<1x128xf32> to vector<8x128xf32>
      %16 = arith.addf %14, %15 : vector<8x128xf32>
      %17 = arith.mulf %16, %16 : vector<8x128xf32>
      %18 = vector.broadcast %13 : vector<1x128xf32> to vector<8x128xf32>
      %19 = arith.mulf %17, %18 : vector<8x128xf32>
      %20 = math.exp %19 : vector<8x128xf32>
      %c0_15 = arith.constant 0 : index
      %c0_16 = arith.constant 0 : index
      %21 = vector.load %arg6[%c0_15, %c0_16] : memref<8x128xf32, #tpu.memory_space<vmem>>, vector<8x128xf32>
      tpu.vector_store %arg6[%c0_15, %c0_16], %20 {strides = array<i32>} : memref<8x128xf32, #tpu.memory_space<vmem>>, vector<8x128xf32>,
    } else {
    }
    return
  }
  func.func @transform_0(%arg0: i32, %arg1: i32, %arg2: i32) -> (i32, i32) {
    %c0_i32 = arith.constant 0 : i32
    return %arg0, %arg2 : i32, i32
  }
  func.func @transform_1(%arg0: i32, %arg1: i32, %arg2: i32) -> (i32, i32) {
    %c0_i32 = arith.constant 0 : i32
    return %arg2, %arg1 : i32, i32
  }
  func.func @transform_2(%arg0: i32, %arg1: i32, %arg2: i32) -> (i32, i32) {
    %c0_i32 = arith.constant 0 : i32
    %c0_i32_0 = arith.constant 0 : i32
    return %c0_i32, %arg1 : i32, i32
  }
  func.func @transform_3(%arg0: i32, %arg1: i32, %arg2: i32) -> (i32, i32) {
    %c0_i32 = arith.constant 0 : i32
    return %arg0, %arg1 : i32, i32
  }
}

</mosaic_0001>

<llo_original>
// kernel: tpu_custom_call.1
$region0: #{tpu_custom_call.1}
  #allocation0 [shape = 'u32[]', space=smem, size = 0x4, offset = 0x4, fixed_abs, tag = 'smem constant byte address 0x4 - core index']
  #allocation1 [shape = 'u32[144,128]{1,0:T(1,128)}', space=vmem, size = 0x12000, scoped, tag = 'internal scratch']
  #allocation2 [shape = 'f32[8,128]{1,0:T(8,128)}', space=vmem, size = 0x1000, scoped, tag = 'scratch operand']
  %s0 = inlined_call_operand.hbm [shape: f32[8,128], index: 0, kind: input, shape index: {}]
  %s1 = inlined_call_operand.hbm [shape: f32[128,128], index: 1, kind: input, shape index: {}]
  %s2 = inlined_call_operand.hbm [shape: f32[8,128], index: 2, kind: input, shape index: {}]
  %s3 = inlined_call_operand.hbm [shape: f32[8,128], index: 3, kind: output, shape index: {}]
  %s4 = sld [smem:[#allocation0]]
  $region42: #{tpu_custom_call.1} parent=0
    _
  %s6 = ssub.s32 1, %s4
  %s7 = scalar_select 0, %s6, %s4
  $region1: #{tpu_custom_call.1} parent=0
    #allocation3 [shape = 'u8[4096]{0}', space=vmem, size = 0x1000, scoped, tag = 'input window, operand 0, single buffered']
    #allocation4 [shape = 's32[1]{0}', space=sflag, size = 0x4, scoped, tag = 'scoped memory for tpu_custom_call.1']
    #allocation5 [shape = 's32[1]{0}', space=sflag, size = 0x4, scoped, tag = 'scoped memory for tpu_custom_call.1']
    #allocation6 [shape = 'u8[65536]{0}', space=vmem, size = 0x10000, scoped, tag = 'input window, operand 1, single buffered']
    #allocation7 [shape = 's32[1]{0}', space=sflag, size = 0x4, scoped, tag = 'scoped memory for tpu_custom_call.1']
    #allocation8 [shape = 'u8[4096]{0}', space=vmem, size = 0x1000, scoped, tag = 'input window, operand 2, single buffered']
    #allocation9 [shape = 'u8[4096]{0}', space=vmem, size = 0x1000, scoped, tag = 'output window, operand 0, single buffered']
    %8 = vsyncpa [#allocation4], 0
    %9 = vsyncpa [#allocation7], 0
    %10 = vsyncpa [#allocation5], 0
    // Predicated region
    $region2: #{tpu_custom_call.1} parent=1 // pred_check
      _
    $region3: #{tpu_custom_call.1} parent=1 // pred_check_branch
      %12 = sbr.rel (0) target = $region5
    $region4: #{tpu_custom_call.1} parent=1 // pred_region
      %s14 = ssub.s32 128, 128
      %15 = vsyncadd [#allocation4], %s14
      %s17 = sshll.u32 [#allocation3], 4
      %s18 = int_to_ptr.vmem [resolvable:$true] %s17
      %20 = dma.hbm_to_vmem [thread:$0]  %s0, 128, %s18, [#allocation4]
    $region5: #{tpu_custom_call.1} parent=1 // pred_fallthru
      _
    // Predicated region
    $region6: #{tpu_custom_call.1} parent=1 // pred_check
      _
    $region7: #{tpu_custom_call.1} parent=1 // pred_check_branch
      %22 = sbr.rel (0) target = $region9
    $region8: #{tpu_custom_call.1} parent=1 // pred_region
      %s24 = ssub.s32 2048, 2048
      %25 = vsyncadd [#allocation7], %s24
      %s26 = sshll.u32 [#allocation6], 4
      %s27 = int_to_ptr.vmem [resolvable:$true] %s26
      %32 = dma.hbm_to_vmem [thread:$0]  %s1, 2048, %s27, [#allocation7], 128, 128, 8
    $region9: #{tpu_custom_call.1} parent=1 // pred_fallthru
      _
    // Predicated region
    $region10: #{tpu_custom_call.1} parent=1 // pred_check
      _
    $region11: #{tpu_custom_call.1} parent=1 // pred_check_branch
      %34 = sbr.rel (0) target = $region13
    $region12: #{tpu_custom_call.1} parent=1 // pred_region
      %s36 = ssub.s32 128, 128
      %37 = vsyncadd [#allocation7], %s36
      %s39 = sshll.u32 [#allocation8], 4
      %s40 = int_to_ptr.vmem [resolvable:$true] %s39
      %42 = dma.hbm_to_vmem [thread:$0]  %s2, 128, %s40, [#allocation7]
    $region13: #{tpu_custom_call.1} parent=1 // pred_fallthru
      _
    // Predicated region
    $region14: #{tpu_custom_call.1} parent=1 // pred_check
      _
    $region15: #{tpu_custom_call.1} parent=1 // pred_check_branch
      %44 = sbr.rel (0) target = $region17
    $region16: #{tpu_custom_call.1} parent=1 // pred_region
      %45 = dma.done [#allocation4], 128
    $region17: #{tpu_custom_call.1} parent=1 // pred_fallthru
      _
    // Predicated region
    $region18: #{tpu_custom_call.1} parent=1 // pred_check
      _
    $region19: #{tpu_custom_call.1} parent=1 // pred_check_branch
      %47 = sbr.rel (0) target = $region21
    $region20: #{tpu_custom_call.1} parent=1 // pred_region
      %48 = dma.done [#allocation7], 2048
    $region21: #{tpu_custom_call.1} parent=1 // pred_fallthru
      _
    // Predicated region
    $region22: #{tpu_custom_call.1} parent=1 // pred_check
      _
    $region23: #{tpu_custom_call.1} parent=1 // pred_check_branch
      %50 = sbr.rel (0) target = $region25
    $region24: #{tpu_custom_call.1} parent=1 // pred_region
      %51 = dma.done [#allocation7], 128
    $region25: #{tpu_custom_call.1} parent=1 // pred_fallthru
      _
    %p52 = scmp.eq.s32.totalorder 0, 0
    // Predicated region
    $region26: #{tpu_custom_call.1} parent=1 // pred_check
      %p53 = pneg %p52
    $region27: #{tpu_custom_call.1} parent=1 // pred_check_branch
      %55 = sbr.rel (%p53) target = $region29
    $region28: #{tpu_custom_call.1} parent=1 // pred_region
      %56 = vst [vmem:[#allocation2] sm:$0xff] 0.0
    $region29: #{tpu_custom_call.1} parent=1 // pred_fallthru
      _
    %v57 = vld [vmem:[#allocation2] sm:$0xff]
    %v58 = vld [vmem:[#allocation3] sm:$0xff]
    %v59 = vld [vmem:[#allocation6] sm:$0xff]
    %v60 = vld [vmem:[#allocation6 + $0x8] sm:$0xff]
    %v61 = vld [vmem:[#allocation6 + $0x10] sm:$0xff]
    %v62 = vld [vmem:[#allocation6 + $0x18] sm:$0xff]
    %v63 = vld [vmem:[#allocation6 + $0x20] sm:$0xff]
    %v64 = vld [vmem:[#allocation6 + $0x28] sm:$0xff]
    %v65 = vld [vmem:[#allocation6 + $0x30] sm:$0xff]
    %v66 = vld [vmem:[#allocation6 + $0x38] sm:$0xff]
    %v67 = vld [vmem:[#allocation6 + $0x40] sm:$0xff]
    %v68 = vld [vmem:[#allocation6 + $0x48] sm:$0xff]
    %v69 = vld [vmem:[#allocation6 + $0x50] sm:$0xff]
    %v70 = vld [vmem:[#allocation6 + $0x58] sm:$0xff]
    %v71 = vld [vmem:[#allocation6 + $0x60] sm:$0xff]
    %v72 = vld [vmem:[#allocation6 + $0x68] sm:$0xff]
    %v73 = vld [vmem:[#allocation6 + $0x70] sm:$0xff]
    %v74 = vld [vmem:[#allocation6 + $0x78] sm:$0xff]
    %75 = vmatprep.subr.mxu0 0.0
    %76 = vmatpush1.msra.mxu0 %v59
    %77 = vmatprep.subr.mxu0 0.0
    %78 = vmatpush1.msra.mxu0 %v60
    %79 = vmatprep.subr.mxu0 0.0
    %80 = vmatpush1.msra.mxu0 %v61
    %81 = vmatprep.subr.mxu0 0.0
    %82 = vmatpush1.msra.mxu0 %v62
    %83 = vmatprep.subr.mxu0 0.0
    %84 = vmatpush1.msra.mxu0 %v63
    %85 = vmatprep.subr.mxu0 0.0
    %86 = vmatpush1.msra.mxu0 %v64
    %87 = vmatprep.subr.mxu0 0.0
    %88 = vmatpush1.msra.mxu0 %v65
    %89 = vmatprep.subr.mxu0 0.0
    %90 = vmatpush1.msra.mxu0 %v66
    %91 = vmatprep.subr.mxu0 0.0
    %92 = vmatpush1.msra.mxu0 %v67
    %93 = vmatprep.subr.mxu0 0.0
    %94 = vmatpush1.msra.mxu0 %v68
    %95 = vmatprep.subr.mxu0 0.0
    %96 = vmatpush1.msra.mxu0 %v69
    %97 = vmatprep.subr.mxu0 0.0
    %98 = vmatpush1.msra.mxu0 %v70
    %99 = vmatprep.subr.mxu0 0.0
    %100 = vmatpush1.msra.mxu0 %v71
    %101 = vmatprep.subr.mxu0 0.0
    %102 = vmatpush1.msra.mxu0 %v72
    %103 = vmatprep.subr.mxu0 0.0
    %104 = vmatpush1.msra.mxu0 %v73
    %105 = vmatprep.subr.mxu0 0.0
    %106 = vmatpush1.msra.mxu0 %v74
    %107 = vmatprep.subr.mxu0 0.0
    %108 = vmatpush1.msra.mxu0 0.0
    %109 = vmatprep.subr.mxu0 0.0
    %110 = vmatpush1.msra.mxu0 0.0
    %111 = vmatprep.subr.mxu0 0.0
    %112 = vmatpush1.msra.mxu0 0.0
    %113 = vmatprep.subr.mxu0 0.0
    %114 = vmatpush1.msra.mxu0 0.0
    %115 = vmatprep.subr.mxu0 0.0
    %116 = vmatpush1.msra.mxu0 0.0
    %117 = vmatprep.subr.mxu0 0.0
    %118 = vmatpush1.msra.mxu0 0.0
    %119 = vmatprep.subr.mxu0 0.0
    %120 = vmatpush1.msra.mxu0 0.0
    %121 = vmatprep.subr.mxu0 0.0
    %122 = vmatpush1.msra.mxu0 0.0
    %123 = vmatprep.subr.mxu0 0.0
    %124 = vmatpush1.msra.mxu0 0.0
    %125 = vmatprep.subr.mxu0 0.0
    %126 = vmatpush1.msra.mxu0 0.0
    %127 = vmatprep.subr.mxu0 0.0
    %128 = vmatpush1.msra.mxu0 0.0
    %129 = vmatprep.subr.mxu0 0.0
    %130 = vmatpush1.msra.mxu0 0.0
    %131 = vmatprep.subr.mxu0 0.0
    %132 = vmatpush1.msra.mxu0 0.0
    %133 = vmatprep.subr.mxu0 0.0
    %134 = vmatpush1.msra.mxu0 0.0
    %135 = vmatprep.subr.mxu0 0.0
    %136 = vmatpush1.msra.mxu0 0.0
    %137 = vmatprep.subr.mxu0 0.0
    %138 = vmatpush1.msra.mxu0 0.0
    %139 = vmatprep.mubr.f32.mxu0 0.0
    %140 = vmatmul.mubr.f32.gmra.mrb[0].mxu0 %v58
    %v141 = vpop.f32.mrb[0].mxu0
    %v142 = vadd.f32 0.0, %v141
    %v143 = vpop.f32.mrb[0].mxu0
    %144 = vdwg.mxu0
    %v145 = vadd.f32 %v57, %v142
    %146 = vst [vmem:[#allocation2] sm:$0xff] %v145
    // Predicated region
    $region30: #{tpu_custom_call.1} parent=1 // pred_check
      %p147 = pneg %p52
    $region31: #{tpu_custom_call.1} parent=1 // pred_check_branch
      %149 = sbr.rel (%p147) target = $region33
    $region32: #{tpu_custom_call.1} parent=1 // pred_region
      %v150 = vld [vmem:[#allocation8] sm:$0x1]
      %v151 = vld [vmem:[#allocation8 + $0x1] sm:$0x1]
      %v152 = vld [vmem:[#allocation2] sm:$0xff]
      %v153 = vlaneseq
      %v154 = vshrl.u32 %v153, 7
      %v155 = vsub.s32 0, %v154
      %v156 = vrot.slane %v150, %v155
      %v157 = vadd.f32 %v152, %v156
      %v158 = vmul.f32 %v157, %v157
      %v159 = vlaneseq
      %v160 = vshrl.u32 %v159, 7
      %v161 = vsub.s32 0, %v160
      %v162 = vrot.slane %v151, %v161
      %v163 = vmul.f32 %v158, %v162
      %v164 = vmul.f32 %v163, 1.442695
      %v165 = vpow.pop %v164
      %166 = vst [vmem:[#allocation9] sm:$0xff] %v165
    $region33: #{tpu_custom_call.1} parent=1 // pred_fallthru
      _
    // Predicated region
    $region34: #{tpu_custom_call.1} parent=1 // pred_check
      _
    $region35: #{tpu_custom_call.1} parent=1 // pred_check_branch
      %168 = sbr.rel (0) target = $region37
    $region36: #{tpu_custom_call.1} parent=1 // pred_region
      %s170 = ssub.s32 128, 128
      %171 = vsyncadd [#allocation5], %s170
      %s173 = sshll.u32 [#allocation9], 4
      %s174 = int_to_ptr.vmem [resolvable:$true] %s173
      %176 = dma.vmem_to_hbm [thread:$0]  %s174, 128, %s3, [#allocation5]
    $region37: #{tpu_custom_call.1} parent=1 // pred_fallthru
      _
    // Predicated region
    $region38: #{tpu_custom_call.1} parent=1 // pred_check
      _
    $region39: #{tpu_custom_call.1} parent=1 // pred_check_branch
      %178 = sbr.rel (0) target = $region41
    $region40: #{tpu_custom_call.1} parent=1 // pred_region
      %179 = dma.done [#allocation5], 128
    $region41: #{tpu_custom_call.1} parent=1 // pred_fallthru
      _
    %180 = vsyncpa [#allocation4], 1
    %181 = vsyncpa [#allocation7], 1
    %182 = vsyncpa [#allocation5], 1

</llo_original>
